<compile_context>
chip_gen: v7x
topology: tpu7x:2x2x1
jax: 0.10.0
libtpu: 0.0.40
codegen_flags: <defaults>
</compile_context>

<pallas_src>
import functools

import jax
import jax.numpy as jnp
from jax import lax
from jax.experimental import pallas as pl
from jax.experimental.pallas import tpu as pltpu

_HALO = 128  # lane halo width for the depthwise shifts (must be >= W + 1)


def _inverted_bottleneck_kernel(
    x_ref, w1_ref, b1_ref, wdw_ref, b2_ref, w3_ref, b3_ref,
    ml_ref, mr_ref, o_ref, *, W, shortcut):
  x = x_ref[0]                                   # (Cin, HW)
  HW = x.shape[1]

  # --- stage 1: 1x1 expand conv (BN scale pre-folded into w1) + bias + ReLU6 -
  h1 = jnp.dot(w1_ref[...], x, preferred_element_type=jnp.float32)  # (Cexp,HW)
  h1 = jnp.clip(h1 + b1_ref[...], 0.0, 6.0)

  # --- stage 2: depthwise 3x3 conv (stride applied by wrapper) ---------------
  # All 9 taps are in-register lane shifts of h1 over a zero halo (vertical
  # image edges -> zeros from the halo).  Taps are grouped by horizontal
  # offset dx so the left/right image-edge lane masks are applied once per
  # column sum instead of once per tap.
  wdw = wdw_ref[...]                             # (9, Cexp, 1), s2 folded in
  zpad = jnp.zeros((h1.shape[0], _HALO), jnp.float32)
  h1p = jnp.concatenate([zpad, h1, zpad], axis=1)    # (Cexp, HW + 2*_HALO)

  def tap(dy, dx):
    d = dy * W + dx
    return h1p[:, _HALO + d:_HALO + d + HW]      # shifted copy, zero-filled

  # tap weight index k = (dy+1)*3 + (dx+1)
  col_c = h1 * wdw[4] + tap(-1, 0) * wdw[1] + tap(1, 0) * wdw[7]
  col_l = tap(-1, -1) * wdw[0] + tap(0, -1) * wdw[3] + tap(1, -1) * wdw[6]
  col_r = tap(-1, 1) * wdw[2] + tap(0, 1) * wdw[5] + tap(1, 1) * wdw[8]
  acc = col_c + col_l * ml_ref[...] + col_r * mr_ref[...]
  h2 = jnp.clip(acc + b2_ref[...], 0.0, 6.0)

  # --- stage 3: 1x1 project conv (BN scale pre-folded) + bias (+ residual) ---
  h3 = jnp.dot(w3_ref[...], h2, preferred_element_type=jnp.float32)  # (Cout,HW)
  h3 = h3 + b3_ref[...]
  if shortcut:                                   # Cin == Cout here
    h3 = h3 + x
  o_ref[0] = h3                                  # lane-dense (HW on lanes)


def _fold_bn(conv_b, gamma, beta, mean, var, eps=1e-5):
  s = gamma / jnp.sqrt(var + eps)
  b = (conv_b - mean) * s + beta
  return s, b


def inverted_bottleneck(x_nchw, params, stride, expand_ratio=6):
  N, Cin, H, W = x_nchw.shape
  Cexp = Cin * expand_ratio
  Cout = params['conv3_w'].shape[0]
  HW = H * W
  shortcut = (stride == 1) and (Cin == Cout)
  assert W + 1 <= _HALO, "image width must be smaller than the lane halo"

  # Fold conv bias + BN (eval mode) into per-channel scale/bias; then fold the
  # scales directly into the conv / depthwise weights (glue, plain JAX, once).
  s1, b1 = _fold_bn(params['conv1_b'], params['bn1_g'], params['bn1_b'],
                    params['bn1_m'], params['bn1_v'])
  s2, b2 = _fold_bn(params['conv2_b'], params['bn2_g'], params['bn2_b'],
                    params['bn2_m'], params['bn2_v'])
  s3, b3 = _fold_bn(params['conv3_b'], params['bn3_g'], params['bn3_b'],
                    params['bn3_m'], params['bn3_v'])

  w1 = params['conv1_w'].reshape(Cexp, Cin) * s1[:, None]          # (Cexp, Cin)
  wdw = (params['conv2_w'].reshape(Cexp, 9) * s2[:, None]) \
      .T.reshape(9, Cexp, 1)                                       # (9, Cexp, 1)
  w3 = params['conv3_w'].reshape(Cout, Cexp) * s3[:, None]         # (Cout, Cexp)
  b1 = b1.reshape(Cexp, 1)
  b2 = b2.reshape(Cexp, 1)
  b3 = b3.reshape(Cout, 1)

  # Image-edge lane masks for the horizontal depthwise taps (constant inputs;
  # constant index_map keeps them VMEM-resident across grid steps).
  xcol = jnp.tile(jnp.arange(W, dtype=jnp.int32), H)[None, :]      # (1, HW)
  mask_r = (xcol < (W - 1)).astype(jnp.float32)                    # dx = +1
  mask_l = (xcol >= 1).astype(jnp.float32)                         # dx = -1

  # NCHW -> (N, C, H*W): free reshape, spatial stays contiguous on lanes.
  x_flat = x_nchw.reshape(N, Cin, HW).astype(jnp.float32)

  kernel = functools.partial(_inverted_bottleneck_kernel, W=W,
                             shortcut=shortcut)
  out_flat = pl.pallas_call(
      kernel,
      out_shape=jax.ShapeDtypeStruct((N, Cout, HW), jnp.float32),
      grid=(N,),
      in_specs=[
          pl.BlockSpec((1, Cin, HW), lambda n: (n, 0, 0)),     # x
          pl.BlockSpec((Cexp, Cin), lambda n: (0, 0)),         # w1 (scaled)
          pl.BlockSpec((Cexp, 1), lambda n: (0, 0)),           # b1
          pl.BlockSpec((9, Cexp, 1), lambda n: (0, 0, 0)),     # wdw (scaled)
          pl.BlockSpec((Cexp, 1), lambda n: (0, 0)),           # b2
          pl.BlockSpec((Cout, Cexp), lambda n: (0, 0)),        # w3 (scaled)
          pl.BlockSpec((Cout, 1), lambda n: (0, 0)),           # b3
          pl.BlockSpec((1, HW), lambda n: (0, 0)),             # mask_l
          pl.BlockSpec((1, HW), lambda n: (0, 0)),             # mask_r
      ],
      out_specs=pl.BlockSpec((1, Cout, HW), lambda n: (n, 0, 0)),
      compiler_params=pltpu.CompilerParams(
          dimension_semantics=("parallel",)),    # v7x megacore across images
  )(x_flat, w1, b1, wdw, b2, w3, b3, mask_l, mask_r)

  out = out_flat.reshape(N, Cout, H, W)          # already NCHW, no transpose
  if stride > 1:
    # Pointwise ops after the depthwise conv commute with subsampling.
    out = out[:, :, ::stride, ::stride]
  return out


# ----------------------------- reference (pure JAX) ---------------------------
def _ref_forward(x, p, stride, eps=1e-5):
  def bn(y, g, b, m, v):
    g, b, m, v = (t[None, :, None, None] for t in (g, b, m, v))
    return (y - m) / jnp.sqrt(v + eps) * g + b

  dn = ('NCHW', 'OIHW', 'NCHW')
  y = lax.conv_general_dilated(x, p['conv1_w'], (1, 1), 'VALID',
                               dimension_numbers=dn)
  y = y + p['conv1_b'][None, :, None, None]
  y = jnp.clip(bn(y, p['bn1_g'], p['bn1_b'], p['bn1_m'], p['bn1_v']), 0.0, 6.0)
  y = lax.conv_general_dilated(y, p['conv2_w'], (stride, stride),
                               ((1, 1), (1, 1)), dimension_numbers=dn,
                               feature_group_count=p['conv2_w'].shape[0])
  y = y + p['conv2_b'][None, :, None, None]
  y = jnp.clip(bn(y, p['bn2_g'], p['bn2_b'], p['bn2_m'], p['bn2_v']), 0.0, 6.0)
  y = lax.conv_general_dilated(y, p['conv3_w'], (1, 1), 'VALID',
                               dimension_numbers=dn)
  y = y + p['conv3_b'][None, :, None, None]
  y = bn(y, p['bn3_g'], p['bn3_b'], p['bn3_m'], p['bn3_v'])
  if stride == 1 and x.shape[1] == y.shape[1]:
    y = y + x
  return y


def _make_params(key, cin, cout, expand_ratio=6):
  cexp = cin * expand_ratio
  ks = jax.random.split(key, 18)
  f = jnp.float32

  def n(k, shape, scale=0.1):
    return (scale * jax.random.normal(k, shape)).astype(f)

  def u(k, shape):
    return jax.random.uniform(k, shape, minval=0.5, maxval=1.5).astype(f)

  return dict(
      conv1_w=n(ks[0], (cexp, cin, 1, 1)), conv1_b=n(ks[1], (cexp,)),
      bn1_g=u(ks[2], (cexp,)), bn1_b=n(ks[3], (cexp,)),
      bn1_m=n(ks[4], (cexp,)), bn1_v=u(ks[5], (cexp,)),
      conv2_w=n(ks[6], (cexp, 1, 3, 3)), conv2_b=n(ks[7], (cexp,)),
      bn2_g=u(ks[8], (cexp,)), bn2_b=n(ks[9], (cexp,)),
      bn2_m=n(ks[10], (cexp,)), bn2_v=u(ks[11], (cexp,)),
      conv3_w=n(ks[12], (cout, cexp, 1, 1)), conv3_b=n(ks[13], (cout,)),
      bn3_g=u(ks[14], (cout,)), bn3_b=n(ks[15], (cout,)),
      bn3_m=n(ks[16], (cout,)), bn3_v=u(ks[17], (cout,)),
  )


if __name__ == "__main__":
  key = jax.random.PRNGKey(0)
  k_x, k_p1, k_p2 = jax.random.split(key, 3)

  N, Cin, H, W = 2, 4, 16, 16
  x = jax.random.normal(k_x, (N, Cin, H, W), dtype=jnp.float32)

  # Case 1: stride=1, in==out -> residual shortcut active.
  p1 = _make_params(k_p1, Cin, Cin)
  out1 = jax.block_until_ready(inverted_bottleneck(x, p1, stride=1))
  ref1 = _ref_forward(x, p1, stride=1)
  assert out1.shape == ref1.shape
  assert jnp.allclose(out1, ref1, rtol=1e-4, atol=1e-4), "stride=1 mismatch"

  # Case 2: stride=2, out_channels=8 -> no shortcut, spatial downsampling.
  p2 = _make_params(k_p2, Cin, 8)
  out2 = jax.block_until_ready(inverted_bottleneck(x, p2, stride=2))
  ref2 = _ref_forward(x, p2, stride=2)
  assert out2.shape == ref2.shape == (N, 8, H // 2, W // 2)
  assert jnp.allclose(out2, ref2, rtol=1e-4, atol=1e-4), "stride=2 mismatch"

  print("KERNEL_OK")
</pallas_src>

<mosaic_0001>
module attributes {stable_mosaic.version = 11 : i64} {
  func.func @_inverted_bottleneck_kernel(%arg0: i32, %arg1: memref<1x4x256xf32, #tpu.memory_space<vmem>>, %arg2: memref<24x4xf32, #tpu.memory_space<vmem>>, %arg3: memref<24x1xf32, #tpu.memory_space<vmem>>, %arg4: memref<9x24x1xf32, #tpu.memory_space<vmem>>, %arg5: memref<24x1xf32, #tpu.memory_space<vmem>>, %arg6: memref<4x24xf32, #tpu.memory_space<vmem>>, %arg7: memref<4x1xf32, #tpu.memory_space<vmem>>, %arg8: memref<1x256xf32, #tpu.memory_space<vmem>>, %arg9: memref<1x256xf32, #tpu.memory_space<vmem>>, %arg10: memref<1x4x256xf32, #tpu.memory_space<vmem>>) attributes {dimension_semantics = [#tpu.dimension_semantics<parallel>], iteration_bounds = array<i64: 2>, scalar_prefetch = 0 : i64, scratch_operands = 0 : i64, tpu.core_type = #tpu.core_type<tc>, window_params = [{transform_indices = @transform_0, window_bounds = array<i64: 1, 4, 256>}, {pipeline_mode = #tpu.pipeline_mode<synchronous>, transform_indices = @transform_1, window_bounds = array<i64: 24, 4>}, {pipeline_mode = #tpu.pipeline_mode<synchronous>, transform_indices = @transform_2, window_bounds = array<i64: 24, 1>}, {pipeline_mode = #tpu.pipeline_mode<synchronous>, transform_indices = @transform_3, window_bounds = array<i64: 9, 24, 1>}, {pipeline_mode = #tpu.pipeline_mode<synchronous>, transform_indices = @transform_4, window_bounds = array<i64: 24, 1>}, {pipeline_mode = #tpu.pipeline_mode<synchronous>, transform_indices = @transform_5, window_bounds = array<i64: 4, 24>}, {pipeline_mode = #tpu.pipeline_mode<synchronous>, transform_indices = @transform_6, window_bounds = array<i64: 4, 1>}, {pipeline_mode = #tpu.pipeline_mode<synchronous>, transform_indices = @transform_7, window_bounds = array<i64: 1, 256>}, {pipeline_mode = #tpu.pipeline_mode<synchronous>, transform_indices = @transform_8, window_bounds = array<i64: 1, 256>}, {transform_indices = @transform_9, window_bounds = array<i64: 1, 4, 256>}]} {
    %c0 = arith.constant 0 : index
    %c0_0 = arith.constant 0 : index
    %c0_1 = arith.constant 0 : index
    %0 = vector.load %arg1[%c0, %c0_0, %c0_1] : memref<1x4x256xf32, #tpu.memory_space<vmem>>, vector<1x4x256xf32>
    %1 = vector.shape_cast %0 : vector<1x4x256xf32> to vector<4x256xf32>
    %c0_2 = arith.constant 0 : index
    %c0_3 = arith.constant 0 : index
    %2 = vector.load %arg2[%c0_2, %c0_3] : memref<24x4xf32, #tpu.memory_space<vmem>>, vector<24x4xf32>
    %cst = arith.constant dense<0.000000e+00> : vector<24x256xf32>
    %3 = tpu.matmul %2, %1, %cst {dimension_numbers = #tpu.dot_dimension_numbers<[1], [0], [0], [1], [0, 0, 1, 1], [], []>} : vector<24x4xf32>, vector<4x256xf32>, vector<24x256xf32> -> vector<24x256xf32>
    %c0_4 = arith.constant 0 : index
    %c0_5 = arith.constant 0 : index
    %4 = vector.load %arg3[%c0_4, %c0_5] : memref<24x1xf32, #tpu.memory_space<vmem>>, vector<24x1xf32>
    %5 = vector.broadcast %4 : vector<24x1xf32> to vector<24x256xf32>
    %6 = arith.addf %3, %5 : vector<24x256xf32>
    %cst_6 = arith.constant 0.000000e+00 : f32
    %cst_7 = arith.constant 6.000000e+00 : f32
    %7 = vector.broadcast %cst_6 : f32 to vector<24x256xf32>
    %8 = arith.maximumf %7, %6 : vector<24x256xf32>
    %9 = vector.broadcast %cst_7 : f32 to vector<24x256xf32>
    %10 = arith.minimumf %9, %8 : vector<24x256xf32>
    %c0_8 = arith.constant 0 : index
    %c0_9 = arith.constant 0 : index
    %c0_10 = arith.constant 0 : index
    %11 = vector.load %arg4[%c0_8, %c0_9, %c0_10] : memref<9x24x1xf32, #tpu.memory_space<vmem>>, vector<9x24x1xf32>
    %cst_11 = arith.constant 0.000000e+00 : f32
    %12 = vector.broadcast %cst_11 : f32 to vector<24x128xf32>
    %13 = tpu.concatenate %12, %10, %12 in 1 : vector<24x128xf32>, vector<24x256xf32>, vector<24x128xf32> -> vector<24x512xf32>
    %14 = vector.extract_strided_slice %11 {offsets = [4, 0, 0], sizes = [1, 24, 1], strides = [1, 1, 1]} : vector<9x24x1xf32> to vector<1x24x1xf32>
    %15 = vector.shape_cast %14 : vector<1x24x1xf32> to vector<24x1xf32>
    %16 = vector.broadcast %15 : vector<24x1xf32> to vector<24x256xf32>
    %17 = arith.mulf %10, %16 : vector<24x256xf32>
    %18 = vector.extract_strided_slice %13 {offsets = [0, 112], sizes = [24, 256], strides = [1, 1]} : vector<24x512xf32> to vector<24x256xf32>
    %19 = vector.extract_strided_slice %11 {offsets = [1, 0, 0], sizes = [1, 24, 1], strides = [1, 1, 1]} : vector<9x24x1xf32> to vector<1x24x1xf32>
    %20 = vector.shape_cast %19 : vector<1x24x1xf32> to vector<24x1xf32>
    %21 = vector.broadcast %20 : vector<24x1xf32> to vector<24x256xf32>
    %22 = arith.mulf %18, %21 : vector<24x256xf32>
    %23 = arith.addf %17, %22 : vector<24x256xf32>
    %24 = vector.extract_strided_slice %13 {offsets = [0, 144], sizes = [24, 256], strides = [1, 1]} : vector<24x512xf32> to vector<24x256xf32>
    %25 = vector.extract_strided_slice %11 {offsets = [7, 0, 0], sizes = [1, 24, 1], strides = [1, 1, 1]} : vector<9x24x1xf32> to vector<1x24x1xf32>
    %26 = vector.shape_cast %25 : vector<1x24x1xf32> to vector<24x1xf32>
    %27 = vector.broadcast %26 : vector<24x1xf32> to vector<24x256xf32>
    %28 = arith.mulf %24, %27 : vector<24x256xf32>
    %29 = arith.addf %23, %28 : vector<24x256xf32>
    %30 = vector.extract_strided_slice %13 {offsets = [0, 111], sizes = [24, 256], strides = [1, 1]} : vector<24x512xf32> to vector<24x256xf32>
    %31 = vector.extract_strided_slice %11 {offsets = [0, 0, 0], sizes = [1, 24, 1], strides = [1, 1, 1]} : vector<9x24x1xf32> to vector<1x24x1xf32>
    %32 = vector.shape_cast %31 : vector<1x24x1xf32> to vector<24x1xf32>
    %33 = vector.broadcast %32 : vector<24x1xf32> to vector<24x256xf32>
    %34 = arith.mulf %30, %33 : vector<24x256xf32>
    %35 = vector.extract_strided_slice %13 {offsets = [0, 127], sizes = [24, 256], strides = [1, 1]} : vector<24x512xf32> to vector<24x256xf32>
    %36 = vector.extract_strided_slice %11 {offsets = [3, 0, 0], sizes = [1, 24, 1], strides = [1, 1, 1]} : vector<9x24x1xf32> to vector<1x24x1xf32>
    %37 = vector.shape_cast %36 : vector<1x24x1xf32> to vector<24x1xf32>
    %38 = vector.broadcast %37 : vector<24x1xf32> to vector<24x256xf32>
    %39 = arith.mulf %35, %38 : vector<24x256xf32>
    %40 = arith.addf %34, %39 : vector<24x256xf32>
    %41 = vector.extract_strided_slice %13 {offsets = [0, 143], sizes = [24, 256], strides = [1, 1]} : vector<24x512xf32> to vector<24x256xf32>
    %42 = vector.extract_strided_slice %11 {offsets = [6, 0, 0], sizes = [1, 24, 1], strides = [1, 1, 1]} : vector<9x24x1xf32> to vector<1x24x1xf32>
    %43 = vector.shape_cast %42 : vector<1x24x1xf32> to vector<24x1xf32>
    %44 = vector.broadcast %43 : vector<24x1xf32> to vector<24x256xf32>
    %45 = arith.mulf %41, %44 : vector<24x256xf32>
    %46 = arith.addf %40, %45 : vector<24x256xf32>
    %47 = vector.extract_strided_slice %13 {offsets = [0, 113], sizes = [24, 256], strides = [1, 1]} : vector<24x512xf32> to vector<24x256xf32>
    %48 = vector.extract_strided_slice %11 {offsets = [2, 0, 0], sizes = [1, 24, 1], strides = [1, 1, 1]} : vector<9x24x1xf32> to vector<1x24x1xf32>
    %49 = vector.shape_cast %48 : vector<1x24x1xf32> to vector<24x1xf32>
    %50 = vector.broadcast %49 : vector<24x1xf32> to vector<24x256xf32>
    %51 = arith.mulf %47, %50 : vector<24x256xf32>
    %52 = vector.extract_strided_slice %13 {offsets = [0, 129], sizes = [24, 256], strides = [1, 1]} : vector<24x512xf32> to vector<24x256xf32>
    %53 = vector.extract_strided_slice %11 {offsets = [5, 0, 0], sizes = [1, 24, 1], strides = [1, 1, 1]} : vector<9x24x1xf32> to vector<1x24x1xf32>
    %54 = vector.shape_cast %53 : vector<1x24x1xf32> to vector<24x1xf32>
    %55 = vector.broadcast %54 : vector<24x1xf32> to vector<24x256xf32>
    %56 = arith.mulf %52, %55 : vector<24x256xf32>
    %57 = arith.addf %51, %56 : vector<24x256xf32>
    %58 = vector.extract_strided_slice %13 {offsets = [0, 145], sizes = [24, 256], strides = [1, 1]} : vector<24x512xf32> to vector<24x256xf32>
    %59 = vector.extract_strided_slice %11 {offsets = [8, 0, 0], sizes = [1, 24, 1], strides = [1, 1, 1]} : vector<9x24x1xf32> to vector<1x24x1xf32>
    %60 = vector.shape_cast %59 : vector<1x24x1xf32> to vector<24x1xf32>
    %61 = vector.broadcast %60 : vector<24x1xf32> to vector<24x256xf32>
    %62 = arith.mulf %58, %61 : vector<24x256xf32>
    %63 = arith.addf %57, %62 : vector<24x256xf32>
    %c0_12 = arith.constant 0 : index
    %c0_13 = arith.constant 0 : index
    %64 = vector.load %arg8[%c0_12, %c0_13] : memref<1x256xf32, #tpu.memory_space<vmem>>, vector<1x256xf32>
    %65 = vector.broadcast %64 : vector<1x256xf32> to vector<24x256xf32>
    %66 = arith.mulf %46, %65 : vector<24x256xf32>
    %67 = arith.addf %29, %66 : vector<24x256xf32>
    %c0_14 = arith.constant 0 : index
    %c0_15 = arith.constant 0 : index
    %68 = vector.load %arg9[%c0_14, %c0_15] : memref<1x256xf32, #tpu.memory_space<vmem>>, vector<1x256xf32>
    %69 = vector.broadcast %68 : vector<1x256xf32> to vector<24x256xf32>
    %70 = arith.mulf %63, %69 : vector<24x256xf32>
    %71 = arith.addf %67, %70 : vector<24x256xf32>
    %c0_16 = arith.constant 0 : index
    %c0_17 = arith.constant 0 : index
    %72 = vector.load %arg5[%c0_16, %c0_17] : memref<24x1xf32, #tpu.memory_space<vmem>>, vector<24x1xf32>
    %73 = vector.broadcast %72 : vector<24x1xf32> to vector<24x256xf32>
    %74 = arith.addf %71, %73 : vector<24x256xf32>
    %cst_18 = arith.constant 0.000000e+00 : f32
    %cst_19 = arith.constant 6.000000e+00 : f32
    %75 = vector.broadcast %cst_18 : f32 to vector<24x256xf32>
    %76 = arith.maximumf %75, %74 : vector<24x256xf32>
    %77 = vector.broadcast %cst_19 : f32 to vector<24x256xf32>
    %78 = arith.minimumf %77, %76 : vector<24x256xf32>
    %c0_20 = arith.constant 0 : index
    %c0_21 = arith.constant 0 : index
    %79 = vector.load %arg6[%c0_20, %c0_21] : memref<4x24xf32, #tpu.memory_space<vmem>>, vector<4x24xf32>
    %cst_22 = arith.constant dense<0.000000e+00> : vector<4x256xf32>
    %80 = tpu.matmul %79, %78, %cst_22 {dimension_numbers = #tpu.dot_dimension_numbers<[1], [0], [0], [1], [0, 0, 1, 1], [], []>} : vector<4x24xf32>, vector<24x256xf32>, vector<4x256xf32> -> vector<4x256xf32>
    %c0_23 = arith.constant 0 : index
    %c0_24 = arith.constant 0 : index
    %81 = vector.load %arg7[%c0_23, %c0_24] : memref<4x1xf32, #tpu.memory_space<vmem>>, vector<4x1xf32>
    %82 = vector.broadcast %81 : vector<4x1xf32> to vector<4x256xf32>
    %83 = arith.addf %80, %82 : vector<4x256xf32>
    %84 = arith.addf %83, %1 : vector<4x256xf32>
    %c0_25 = arith.constant 0 : index
    %c0_26 = arith.constant 0 : index
    %c0_27 = arith.constant 0 : index
    %85 = vector.load %arg10[%c0_25, %c0_26, %c0_27] : memref<1x4x256xf32, #tpu.memory_space<vmem>>, vector<1x4x256xf32>
    %86 = vector.shape_cast %85 : vector<1x4x256xf32> to vector<4x256xf32>
    %87 = vector.shape_cast %84 : vector<4x256xf32> to vector<1x4x256xf32>
    tpu.vector_store %arg10[%c0_25, %c0_26, %c0_27], %87 {strides = array<i32>} : memref<1x4x256xf32, #tpu.memory_space<vmem>>, vector<1x4x256xf32>,
    return
  }
  func.func @transform_0(%arg0: i32) -> (i32, i32, i32) {
    %c0_i32 = arith.constant 0 : i32
    %c0_i32_0 = arith.constant 0 : i32
    %c0_i32_1 = arith.constant 0 : i32
    return %arg0, %c0_i32, %c0_i32_0 : i32, i32, i32
  }
  func.func @transform_1(%arg0: i32) -> (i32, i32) {
    %c0_i32 = arith.constant 0 : i32
    %c0_i32_0 = arith.constant 0 : i32
    %c0_i32_1 = arith.constant 0 : i32
    return %c0_i32, %c0_i32_0 : i32, i32
  }
  func.func @transform_2(%arg0: i32) -> (i32, i32) {
    %c0_i32 = arith.constant 0 : i32
    %c0_i32_0 = arith.constant 0 : i32
    %c0_i32_1 = arith.constant 0 : i32
    return %c0_i32, %c0_i32_0 : i32, i32
  }
  func.func @transform_3(%arg0: i32) -> (i32, i32, i32) {
    %c0_i32 = arith.constant 0 : i32
    %c0_i32_0 = arith.constant 0 : i32
    %c0_i32_1 = arith.constant 0 : i32
    %c0_i32_2 = arith.constant 0 : i32
    return %c0_i32, %c0_i32_0, %c0_i32_1 : i32, i32, i32
  }
  func.func @transform_4(%arg0: i32) -> (i32, i32) {
    %c0_i32 = arith.constant 0 : i32
    %c0_i32_0 = arith.constant 0 : i32
    %c0_i32_1 = arith.constant 0 : i32
    return %c0_i32, %c0_i32_0 : i32, i32
  }
  func.func @transform_5(%arg0: i32) -> (i32, i32) {
    %c0_i32 = arith.constant 0 : i32
    %c0_i32_0 = arith.constant 0 : i32
    %c0_i32_1 = arith.constant 0 : i32
    return %c0_i32, %c0_i32_0 : i32, i32
  }
  func.func @transform_6(%arg0: i32) -> (i32, i32) {
    %c0_i32 = arith.constant 0 : i32
    %c0_i32_0 = arith.constant 0 : i32
    %c0_i32_1 = arith.constant 0 : i32
    return %c0_i32, %c0_i32_0 : i32, i32
  }
  func.func @transform_7(%arg0: i32) -> (i32, i32) {
    %c0_i32 = arith.constant 0 : i32
    %c0_i32_0 = arith.constant 0 : i32
    %c0_i32_1 = arith.constant 0 : i32
    return %c0_i32, %c0_i32_0 : i32, i32
  }
  func.func @transform_8(%arg0: i32) -> (i32, i32) {
    %c0_i32 = arith.constant 0 : i32
    %c0_i32_0 = arith.constant 0 : i32
    %c0_i32_1 = arith.constant 0 : i32
    return %c0_i32, %c0_i32_0 : i32, i32
  }
  func.func @transform_9(%arg0: i32) -> (i32, i32, i32) {
    %c0_i32 = arith.constant 0 : i32
    %c0_i32_0 = arith.constant 0 : i32
    %c0_i32_1 = arith.constant 0 : i32
    return %arg0, %c0_i32, %c0_i32_0 : i32, i32, i32
  }
}

</mosaic_0001>

<llo_original>
// kernel: tpu_custom_call.1
$region0: #{tpu_custom_call.1}
  #allocation0 [shape = 'u32[]', space=smem, size = 0x4, offset = 0x4, fixed_abs, tag = 'smem constant byte address 0x4 - core index']
  #allocation1 [shape = 'u32[144,128]{1,0:T(1,128)}', space=vmem, size = 0x12000, scoped, tag = 'internal scratch']
  %s0 = inlined_call_operand.vmem [shape: f32[2,4,256], index: 0, kind: input, shape index: {}]
  %s1 = inlined_call_operand.vmem [shape: f32[24,4], index: 1, kind: input, shape index: {}]
  %s2 = inlined_call_operand.vmem [shape: f32[24,1], index: 2, kind: input, shape index: {}]
  %s3 = inlined_call_operand.vmem [shape: f32[9,24,1], index: 3, kind: input, shape index: {}]
  %s4 = inlined_call_operand.vmem [shape: f32[24,1], index: 4, kind: input, shape index: {}]
  %s5 = inlined_call_operand.vmem [shape: f32[4,24], index: 5, kind: input, shape index: {}]
  %s6 = inlined_call_operand.vmem [shape: f32[4,1], index: 6, kind: input, shape index: {}]
  %s7 = inlined_call_operand.vmem [shape: f32[1,256], index: 7, kind: input, shape index: {}]
  %s8 = inlined_call_operand.vmem [shape: f32[1,256], index: 8, kind: input, shape index: {}]
  %s9 = inlined_call_operand.hbm [shape: f32[2,4,256], index: 9, kind: output, shape index: {}]
  %s10 = sld [smem:[#allocation0]]
  $region69: #{tpu_custom_call.1} parent=0
    _
  %s12 = ssub.s32 1, %s10
  %s13 = scalar_select 0, %s12, %s10
  $region1: #{tpu_custom_call.1} parent=0
    #allocation2 [shape = 'u8[8192]{0}', space=vmem, size = 0x2000, scoped, tag = 'output window, operand 0']
    #allocation3 [shape = 's32[2]{0}', space=sflag, size = 0x8, scoped, tag = 'scoped memory for tpu_custom_call.1']
    %14 = vsyncpa [#allocation3], 0
    %s15 = scalar_lea.sflag [#allocation3], 1
    %16 = vsyncpa %s15, 0
    loop: start=0, step=1, limit=4
    $region2: #{tpu_custom_call.1} parent=1 // loop_pre_header
      _
    $region3: #{tpu_custom_call.1} parent=1 // loop_header
      %s18 = sphi 0, %s22
      %p19 = scmp.ge.s32.totalorder %s18, 4
      %s28 = sphi 0, %s30
      %s31 = sphi 0, %s28
      %s32 = sphi 0, %s31
      %s48 = sphi 0, %s32
      %s52 = sphi 0, %s52
      %s54 = sphi 0, %s52
      %s55 = sphi 0, %s54
      %s69 = sphi 0, %s55
      %s73 = sphi 0, %s73
      %s75 = sphi 0, %s73
      %s76 = sphi 0, %s75
      %s90 = sphi 0, %s76
      %s94 = sphi 0, %s94
      %s96 = sphi 0, %s94
      %s97 = sphi 0, %s96
      %s111 = sphi 0, %s97
      %s115 = sphi 0, %s115
      %s117 = sphi 0, %s115
      %s118 = sphi 0, %s117
      %s132 = sphi 0, %s118
      %s136 = sphi 0, %s136
      %s138 = sphi 0, %s136
      %s139 = sphi 0, %s138
      %s153 = sphi 0, %s139
      %s157 = sphi 0, %s157
      %s159 = sphi 0, %s157
      %s160 = sphi 0, %s159
      %s174 = sphi 0, %s160
      %s178 = sphi 0, %s178
      %s180 = sphi 0, %s178
      %s181 = sphi 0, %s180
      %s195 = sphi 0, %s181
      %s199 = sphi 0, %s199
      %s201 = sphi 0, %s199
      %s202 = sphi 0, %s201
      %s216 = sphi 0, %s202
      %s222 = sphi 0, %s224
      %s225 = sphi 0, %s222
      %s226 = sphi 0, %s225
      %s242 = sphi 0, %s226
    $region4: #{tpu_custom_call.1} parent=1 // loop_header_branch
      %21 = sbr.rel (%p19) target = $region8
    $region5: #{tpu_custom_call.1} parent=1 // loop_body
      %s23 = ssub.s32 %s18, 1
      %s24 = ssub.s32 %s18, 2
      %s25 = sadd.s32 %s18, 1
      %s26 = ssub.s32 %s18, %s25
      %p27 = scmp.eq.s32.totalorder %s26, 0
      %s29 = sadd.s32 %s28, 1
      %s30 = scalar_select %p27, %s28, %s29
      %p33 = pneg %p27
      %p34 = scmp.eq.s32.totalorder %s18, 1
      %p35 = por %p33, %p34
      %p36 = scmp.ne.s32.totalorder %s28, %s31
      %p37 = scmp.eq.s32.totalorder %s18, 0
      %p38 = por %p36, %p37
      %p39 = scmp.ne.s32.totalorder %s28, %s31
      %p40 = scmp.eq.s32.totalorder %s23, 1
      %p41 = por %p39, %p40
      %p42 = scmp.ne.s32.totalorder %s31, %s32
      %p43 = scmp.eq.s32.totalorder %s23, 0
      %p44 = por %p42, %p43
      %p45 = scmp.ne.s32.totalorder %s31, %s32
      %p46 = scmp.eq.s32.totalorder %s24, 1
      %p47 = por %p45, %p46
      %p49 = scmp.ne.s32.totalorder %s32, %s48
      %p50 = scmp.eq.s32.totalorder %s24, 0
      %p51 = por %p49, %p50
      %s53 = sadd.s32 %s52, 1
      %p56 = scmp.eq.s32.totalorder %s18, 1
      %p57 = scmp.ne.s32.totalorder %s52, %s54
      %p58 = scmp.eq.s32.totalorder %s18, 0
      %p59 = por %p57, %p58
      %p60 = scmp.ne.s32.totalorder %s52, %s54
      %p61 = scmp.eq.s32.totalorder %s23, 1
      %p62 = por %p60, %p61
      %p63 = scmp.ne.s32.totalorder %s54, %s55
      %p64 = scmp.eq.s32.totalorder %s23, 0
      %p65 = por %p63, %p64
      %p66 = scmp.ne.s32.totalorder %s54, %s55
      %p67 = scmp.eq.s32.totalorder %s24, 1
      %p68 = por %p66, %p67
      %p70 = scmp.ne.s32.totalorder %s55, %s69
      %p71 = scmp.eq.s32.totalorder %s24, 0
      %p72 = por %p70, %p71
      %s74 = sadd.s32 %s73, 1
      %p77 = scmp.eq.s32.totalorder %s18, 1
      %p78 = scmp.ne.s32.totalorder %s73, %s75
      %p79 = scmp.eq.s32.totalorder %s18, 0
      %p80 = por %p78, %p79
      %p81 = scmp.ne.s32.totalorder %s73, %s75
      %p82 = scmp.eq.s32.totalorder %s23, 1
      %p83 = por %p81, %p82
      %p84 = scmp.ne.s32.totalorder %s75, %s76
      %p85 = scmp.eq.s32.totalorder %s23, 0
      %p86 = por %p84, %p85
      %p87 = scmp.ne.s32.totalorder %s75, %s76
      %p88 = scmp.eq.s32.totalorder %s24, 1
      %p89 = por %p87, %p88
      %p91 = scmp.ne.s32.totalorder %s76, %s90
      %p92 = scmp.eq.s32.totalorder %s24, 0
      %p93 = por %p91, %p92
      %s95 = sadd.s32 %s94, 1
      %p98 = scmp.eq.s32.totalorder %s18, 1
      %p99 = scmp.ne.s32.totalorder %s94, %s96
      %p100 = scmp.eq.s32.totalorder %s18, 0
      %p101 = por %p99, %p100
      %p102 = scmp.ne.s32.totalorder %s94, %s96
      %p103 = scmp.eq.s32.totalorder %s23, 1
      %p104 = por %p102, %p103
      %p105 = scmp.ne.s32.totalorder %s96, %s97
      %p106 = scmp.eq.s32.totalorder %s23, 0
      %p107 = por %p105, %p106
      %p108 = scmp.ne.s32.totalorder %s96, %s97
      %p109 = scmp.eq.s32.totalorder %s24, 1
      %p110 = por %p108, %p109
      %p112 = scmp.ne.s32.totalorder %s97, %s111
      %p113 = scmp.eq.s32.totalorder %s24, 0
      %p114 = por %p112, %p113
      %s116 = sadd.s32 %s115, 1
      %p119 = scmp.eq.s32.totalorder %s18, 1
      %p120 = scmp.ne.s32.totalorder %s115, %s117
      %p121 = scmp.eq.s32.totalorder %s18, 0
      %p122 = por %p120, %p121
      %p123 = scmp.ne.s32.totalorder %s115, %s117
      %p124 = scmp.eq.s32.totalorder %s23, 1
      %p125 = por %p123, %p124
      %p126 = scmp.ne.s32.totalorder %s117, %s118
      %p127 = scmp.eq.s32.totalorder %s23, 0
      %p128 = por %p126, %p127
      %p129 = scmp.ne.s32.totalorder %s117, %s118
      %p130 = scmp.eq.s32.totalorder %s24, 1
      %p131 = por %p129, %p130
      %p133 = scmp.ne.s32.totalorder %s118, %s132
      %p134 = scmp.eq.s32.totalorder %s24, 0
      %p135 = por %p133, %p134
      %s137 = sadd.s32 %s136, 1
      %p140 = scmp.eq.s32.totalorder %s18, 1
      %p141 = scmp.ne.s32.totalorder %s136, %s138
      %p142 = scmp.eq.s32.totalorder %s18, 0
      %p143 = por %p141, %p142
      %p144 = scmp.ne.s32.totalorder %s136, %s138
      %p145 = scmp.eq.s32.totalorder %s23, 1
      %p146 = por %p144, %p145
      %p147 = scmp.ne.s32.totalorder %s138, %s139
      %p148 = scmp.eq.s32.totalorder %s23, 0
      %p149 = por %p147, %p148
      %p150 = scmp.ne.s32.totalorder %s138, %s139
      %p151 = scmp.eq.s32.totalorder %s24, 1
      %p152 = por %p150, %p151
      %p154 = scmp.ne.s32.totalorder %s139, %s153
      %p155 = scmp.eq.s32.totalorder %s24, 0
      %p156 = por %p154, %p155
      %s158 = sadd.s32 %s157, 1
      %p161 = scmp.eq.s32.totalorder %s18, 1
      %p162 = scmp.ne.s32.totalorder %s157, %s159
      %p163 = scmp.eq.s32.totalorder %s18, 0
      %p164 = por %p162, %p163
      %p165 = scmp.ne.s32.totalorder %s157, %s159
      %p166 = scmp.eq.s32.totalorder %s23, 1
      %p167 = por %p165, %p166
      %p168 = scmp.ne.s32.totalorder %s159, %s160
      %p169 = scmp.eq.s32.totalorder %s23, 0
      %p170 = por %p168, %p169
      %p171 = scmp.ne.s32.totalorder %s159, %s160
      %p172 = scmp.eq.s32.totalorder %s24, 1
      %p173 = por %p171, %p172
      %p175 = scmp.ne.s32.totalorder %s160, %s174
      %p176 = scmp.eq.s32.totalorder %s24, 0
      %p177 = por %p175, %p176
      %s179 = sadd.s32 %s178, 1
      %p182 = scmp.eq.s32.totalorder %s18, 1
      %p183 = scmp.ne.s32.totalorder %s178, %s180
      %p184 = scmp.eq.s32.totalorder %s18, 0
      %p185 = por %p183, %p184
      %p186 = scmp.ne.s32.totalorder %s178, %s180
      %p187 = scmp.eq.s32.totalorder %s23, 1
      %p188 = por %p186, %p187
      %p189 = scmp.ne.s32.totalorder %s180, %s181
      %p190 = scmp.eq.s32.totalorder %s23, 0
      %p191 = por %p189, %p190
      %p192 = scmp.ne.s32.totalorder %s180, %s181
      %p193 = scmp.eq.s32.totalorder %s24, 1
      %p194 = por %p192, %p193
      %p196 = scmp.ne.s32.totalorder %s181, %s195
      %p197 = scmp.eq.s32.totalorder %s24, 0
      %p198 = por %p196, %p197
      %s200 = sadd.s32 %s199, 1
      %p203 = scmp.eq.s32.totalorder %s18, 1
      %p204 = scmp.ne.s32.totalorder %s199, %s201
      %p205 = scmp.eq.s32.totalorder %s18, 0
      %p206 = por %p204, %p205
      %p207 = scmp.ne.s32.totalorder %s199, %s201
      %p208 = scmp.eq.s32.totalorder %s23, 1
      %p209 = por %p207, %p208
      %p210 = scmp.ne.s32.totalorder %s201, %s202
      %p211 = scmp.eq.s32.totalorder %s23, 0
      %p212 = por %p210, %p211
      %p213 = scmp.ne.s32.totalorder %s201, %s202
      %p214 = scmp.eq.s32.totalorder %s24, 1
      %p215 = por %p213, %p214
      %p217 = scmp.ne.s32.totalorder %s202, %s216
      %p218 = scmp.eq.s32.totalorder %s24, 0
      %p219 = por %p217, %p218
      %s220 = ssub.s32 %s18, %s25
      %p221 = scmp.eq.s32.totalorder %s220, 0
      %s223 = sadd.s32 %s222, 1
      %s224 = scalar_select %p221, %s222, %s223
      %p227 = pneg %p221
      %p228 = scmp.eq.s32.totalorder %s18, 1
      %p229 = por %p227, %p228
      %p230 = scmp.ne.s32.totalorder %s222, %s225
      %p231 = scmp.eq.s32.totalorder %s18, 0
      %p232 = por %p230, %p231
      %p233 = scmp.ne.s32.totalorder %s222, %s225
      %p234 = scmp.eq.s32.totalorder %s23, 1
      %p235 = por %p233, %p234
      %p236 = scmp.ne.s32.totalorder %s225, %s226
      %p237 = scmp.eq.s32.totalorder %s23, 0
      %p238 = por %p236, %p237
      %p239 = scmp.ne.s32.totalorder %s225, %s226
      %p240 = scmp.eq.s32.totalorder %s24, 1
      %p241 = por %p239, %p240
      %p243 = scmp.ne.s32.totalorder %s226, %s242
      %p244 = scmp.eq.s32.totalorder %s24, 0
      %p245 = por %p243, %p244
      %p246 = scmp.le.s32.totalorder 1, %s18
      %p247 = scmp.lt.s32.totalorder %s18, 3
      %p248 = pnand %p246, %p247
      %p249 = pneg %p248
      // Predicated region
      $region9: #{tpu_custom_call.1} parent=5 // pred_check
        _
      $region10: #{tpu_custom_call.1} parent=5 // pred_check_branch
        %251 = sbr.rel (%p248) target = $region12
      $region11: #{tpu_custom_call.1} parent=5 // pred_region
        %s252 = ssub.s32 %s18, 1
        // Predicated region
        $region13: #{tpu_custom_call.1} parent=11 // pred_check
          %p253 = pneg %p65
        $region14: #{tpu_custom_call.1} parent=11 // pred_check_branch
          %255 = sbr.rel (%p253) target = $region16
        $region15: #{tpu_custom_call.1} parent=11 // pred_region
          _
        $region16: #{tpu_custom_call.1} parent=11 // pred_fallthru
          _
        // Predicated region
        $region17: #{tpu_custom_call.1} parent=11 // pred_check
          %p256 = pneg %p86
        $region18: #{tpu_custom_call.1} parent=11 // pred_check_branch
          %258 = sbr.rel (%p256) target = $region20
        $region19: #{tpu_custom_call.1} parent=11 // pred_region
          _
        $region20: #{tpu_custom_call.1} parent=11 // pred_fallthru
          _
        // Predicated region
        $region21: #{tpu_custom_call.1} parent=11 // pred_check
          %p259 = pneg %p107
        $region22: #{tpu_custom_call.1} parent=11 // pred_check_branch
          %261 = sbr.rel (%p259) target = $region24
        $region23: #{tpu_custom_call.1} parent=11 // pred_region
          _
        $region24: #{tpu_custom_call.1} parent=11 // pred_fallthru
          _
        // Predicated region
        $region25: #{tpu_custom_call.1} parent=11 // pred_check
          %p262 = pneg %p128
        $region26: #{tpu_custom_call.1} parent=11 // pred_check_branch
          %264 = sbr.rel (%p262) target = $region28
        $region27: #{tpu_custom_call.1} parent=11 // pred_region
          _
        $region28: #{tpu_custom_call.1} parent=11 // pred_fallthru
          _
        // Predicated region
        $region29: #{tpu_custom_call.1} parent=11 // pred_check
          %p265 = pneg %p149
        $region30: #{tpu_custom_call.1} parent=11 // pred_check_branch
          %267 = sbr.rel (%p265) target = $region32
        $region31: #{tpu_custom_call.1} parent=11 // pred_region
          _
        $region32: #{tpu_custom_call.1} parent=11 // pred_fallthru
          _
        // Predicated region
        $region33: #{tpu_custom_call.1} parent=11 // pred_check
          %p268 = pneg %p170
        $region34: #{tpu_custom_call.1} parent=11 // pred_check_branch
          %270 = sbr.rel (%p268) target = $region36
        $region35: #{tpu_custom_call.1} parent=11 // pred_region
          _
        $region36: #{tpu_custom_call.1} parent=11 // pred_fallthru
          _
        // Predicated region
        $region37: #{tpu_custom_call.1} parent=11 // pred_check
          %p271 = pneg %p191
        $region38: #{tpu_custom_call.1} parent=11 // pred_check_branch
          %273 = sbr.rel (%p271) target = $region40
        $region39: #{tpu_custom_call.1} parent=11 // pred_region
          _
        $region40: #{tpu_custom_call.1} parent=11 // pred_fallthru
          _
        // Predicated region
        $region41: #{tpu_custom_call.1} parent=11 // pred_check
          %p274 = pneg %p212
        $region42: #{tpu_custom_call.1} parent=11 // pred_check_branch
          %276 = sbr.rel (%p274) target = $region44
        $region43: #{tpu_custom_call.1} parent=11 // pred_region
          _
        $region44: #{tpu_custom_call.1} parent=11 // pred_fallthru
          _
      $region12: #{tpu_custom_call.1} parent=5 // pred_fallthru
        _
      %p277 = scmp.lt.s32.totalorder %s18, 2
      // Predicated region
      $region45: #{tpu_custom_call.1} parent=5 // pred_check
        %p278 = pneg %p277
      $region46: #{tpu_custom_call.1} parent=5 // pred_check_branch
        %280 = sbr.rel (%p278) target = $region48
      $region47: #{tpu_custom_call.1} parent=5 // pred_region
        // Predicated region
        $region49: #{tpu_custom_call.1} parent=47 // pred_check
          %p281 = pneg %p38
        $region50: #{tpu_custom_call.1} parent=47 // pred_check_branch
          %283 = sbr.rel (%p281) target = $region52
        $region51: #{tpu_custom_call.1} parent=47 // pred_region
          %p284 = scmp.lt.s32.totalorder %s18, 1
          %s285 = scalar_select %p284, %s18, 1
          %s286 = smul.addr %s285, 2
          %s287 = smul.addr %s286, 4
          %s288 = scalar_lea.vmem %s0, %s287
        $region52: #{tpu_custom_call.1} parent=47 // pred_fallthru
          _
      $region48: #{tpu_custom_call.1} parent=5 // pred_fallthru
        _
      %p289 = scmp.le.s32.totalorder 1, %s18
      %p290 = scmp.lt.s32.totalorder %s18, 3
      %p291 = pnand %p289, %p290
      %p292 = pneg %p291
      // Predicated region
      $region53: #{tpu_custom_call.1} parent=5 // pred_check
        _
      $region54: #{tpu_custom_call.1} parent=5 // pred_check_branch
        %294 = sbr.rel (%p291) target = $region56
      $region55: #{tpu_custom_call.1} parent=5 // pred_region
        %s295 = ssub.s32 %s18, 1
        %p296 = scmp.lt.s32.totalorder %s23, 1
        %s297 = scalar_select %p296, %s23, 1
        %s298 = smul.addr %s297, 2
        %s299 = smul.addr %s298, 4
        %s300 = scalar_lea.vmem %s0, %s299
        %p301 = pneg %p44
        %p302 = pneg %p41
        %p303 = pneg %p65
        %p304 = pneg %p62
        %p305 = pneg %p86
        %p306 = pneg %p83
        %p307 = pneg %p107
        %p308 = pneg %p104
        %p309 = pneg %p128
        %p310 = pneg %p125
        %p311 = pneg %p149
        %p312 = pneg %p146
        %p313 = pneg %p170
        %p314 = pneg %p167
        %p315 = pneg %p191
        %p316 = pneg %p188
        %p317 = pneg %p212
        %p318 = pneg %p209
        %p319 = pneg %p238
        %p320 = pneg %p235
        %s321 = sand.u32 %s225, 1
        %s322 = scalar_lea.sflag [#allocation3], %s321
        %s323 = sand.u32 %s225, 1
        %s324 = smul.addr %s323, 8
        %s325 = scalar_lea.vmem [#allocation2], %s324
        %p326 = scmp.lt.s32.totalorder %s23, 1
        %s327 = scalar_select %p326, %s23, 1
        %s328 = smul.addr %s327, 2
        %s329 = smul.addr %s328, 4
        %s330 = scalar_lea.vmem %s0, %s329
        %v331 = vld [vmem:[%s330] sm:$0xff]
        %v332 = vld [vmem:[%s1] sm:$0xff]
        %v333 = vld [vmem:[%s1 + $0x8] sm:$0xff]
        %v334 = vld [vmem:[%s1 + $0x10] sm:$0xff]
        %v335 = vld [vmem:[%s2] sm:$0xff]
        %v336 = vld [vmem:[%s2 + $0x8] sm:$0xff]
        %v337 = vld [vmem:[%s2 + $0x10] sm:$0xff]
        %339 = vset.pattern.permute.xlu0 0
        %340 = vperm.xlu0 %339, %v335
        %v341 = vpop.permute.xlu0 %340
        %344 = vset.pattern.permute.xlu0 0
        %345 = vperm.xlu0 %344, %v336
        %v346 = vpop.permute.xlu0 %345
        %349 = vset.pattern.permute.xlu0 0
        %350 = vperm.xlu0 %349, %v337
        %v351 = vpop.permute.xlu0 %350
        %v354 = vcombine.high %v331, %v331
        %vm355 = vcmask 31744
        %v357 = vsel %vm355, %v332, 0
        %v360 = vsel %vm355, %v333, 0
        %v363 = vsel %vm355, %v334, 0
        %vm365 = vcmask 1043456
        %v366 = vsel %vm365, %v331, 0
        %v368 = vsel %vm365, %v354, 0
        %370 = vmatprep.subr.mxu0 %v368
        %371 = vmatpush1.msra.mxu0 %v366
        %372 = vmatprep.subr.mxu0 0.0
        %373 = vmatpush1.msra.mxu0 0.0
        %374 = vmatprep.subr.mxu0 0.0
        %375 = vmatpush1.msra.mxu0 0.0
        %376 = vmatprep.subr.mxu0 0.0
        %377 = vmatpush1.msra.mxu0 0.0
        %378 = vmatprep.subr.mxu0 0.0
        %379 = vmatpush1.msra.mxu0 0.0
        %380 = vmatprep.subr.mxu0 0.0
        %381 = vmatpush1.msra.mxu0 0.0
        %382 = vmatprep.subr.mxu0 0.0
        %383 = vmatpush1.msra.mxu0 0.0
        %384 = vmatprep.subr.mxu0 0.0
        %385 = vmatpush1.msra.mxu0 0.0
        %386 = vmatprep.subr.mxu0 0.0
        %387 = vmatpush1.msra.mxu0 0.0
        %388 = vmatprep.subr.mxu0 0.0
        %389 = vmatpush1.msra.mxu0 0.0
        %390 = vmatprep.subr.mxu0 0.0
        %391 = vmatpush1.msra.mxu0 0.0
        %392 = vmatprep.subr.mxu0 0.0
        %393 = vmatpush1.msra.mxu0 0.0
        %394 = vmatprep.subr.mxu0 0.0
        %395 = vmatpush1.msra.mxu0 0.0
        %396 = vmatprep.subr.mxu0 0.0
        %397 = vmatpush1.msra.mxu0 0.0
        %398 = vmatprep.subr.mxu0 0.0
        %399 = vmatpush1.msra.mxu0 0.0
        %400 = vmatprep.subr.mxu0 0.0
        %401 = vmatpush1.msra.mxu0 0.0
        %402 = vmatprep.subr.mxu0 0.0
        %403 = vmatpush1.msra.mxu0 0.0
        %404 = vmatprep.subr.mxu0 0.0
        %405 = vmatpush1.msra.mxu0 0.0
        %406 = vmatprep.subr.mxu0 0.0
        %407 = vmatpush1.msra.mxu0 0.0
        %408 = vmatprep.subr.mxu0 0.0
        %409 = vmatpush1.msra.mxu0 0.0
        %410 = vmatprep.subr.mxu0 0.0
        %411 = vmatpush1.msra.mxu0 0.0
        %412 = vmatprep.subr.mxu0 0.0
        %413 = vmatpush1.msra.mxu0 0.0
        %414 = vmatprep.subr.mxu0 0.0
        %415 = vmatpush1.msra.mxu0 0.0
        %416 = vmatprep.subr.mxu0 0.0
        %417 = vmatpush1.msra.mxu0 0.0
        %418 = vmatprep.subr.mxu0 0.0
        %419 = vmatpush1.msra.mxu0 0.0
        %420 = vmatprep.subr.mxu0 0.0
        %421 = vmatpush1.msra.mxu0 0.0
        %422 = vmatprep.subr.mxu0 0.0
        %423 = vmatpush1.msra.mxu0 0.0
        %424 = vmatprep.subr.mxu0 0.0
        %425 = vmatpush1.msra.mxu0 0.0
        %426 = vmatprep.subr.mxu0 0.0
        %427 = vmatpush1.msra.mxu0 0.0
        %428 = vmatprep.subr.mxu0 0.0
        %429 = vmatpush1.msra.mxu0 0.0
        %430 = vmatprep.subr.mxu0 0.0
        %431 = vmatpush1.msra.mxu0 0.0
        %432 = vmatprep.subr.mxu0 0.0
        %433 = vmatpush1.msra.mxu0 0.0
        %434 = vmatprep.mubr.f32.mxu0 0.0
        %435 = vmatmul.mubr.f32.gmra.mrb[0].mxu0 %v357
        %v436 = vpop.f32.mrb[0].mxu0
        %v437 = vadd.f32 %v341, %v436
        %v438 = vpop.f32.mrb[0].mxu0
        %v439 = vadd.f32 %v341, %v438
        %440 = vmatprep.mubr.f32.mxu0 0.0
        %441 = vmatmul.mubr.f32.gmra.mrb[0].mxu0 %v360
        %v442 = vpop.f32.mrb[0].mxu0
        %v443 = vadd.f32 %v346, %v442
        %v444 = vpop.f32.mrb[0].mxu0
        %v445 = vadd.f32 %v346, %v444
        %446 = vmatprep.mubr.f32.mxu0 0.0
        %447 = vmatmul.mubr.f32.gmra.mrb[0].mxu0 %v363
        %v448 = vpop.f32.mrb[0].mxu0
        %v449 = vadd.f32 %v351, %v448
        %v450 = vpop.f32.mrb[0].mxu0
        %v451 = vadd.f32 %v351, %v450
        %452 = vdwg.mxu0
        %v453 = vmax.f32 %v437, 0.0
        %v454 = vmax.f32 %v439, 0.0
        %v455 = vmax.f32 %v443, 0.0
        %v456 = vmax.f32 %v445, 0.0
        %v457 = vmax.f32 %v449, 0.0
        %v458 = vmax.f32 %v451, 0.0
        %v459 = vmin.f32 %v453, 6.0
        %v460 = vmin.f32 %v454, 6.0
        %v461 = vmin.f32 %v455, 6.0
        %v462 = vmin.f32 %v456, 6.0
        %v463 = vmin.f32 %v457, 6.0
        %v464 = vmin.f32 %v458, 6.0
        %v465 = vld [vmem:[%s3] sm:$0xff]
        %v466 = vld [vmem:[%s3 + $0x8] sm:$0xff]
        %v467 = vld [vmem:[%s3 + $0x10] sm:$0xff]
        %v468 = vld [vmem:[%s3 + $0x18] sm:$0xff]
        %v469 = vld [vmem:[%s3 + $0x20] sm:$0xff]
        %v470 = vld [vmem:[%s3 + $0x28] sm:$0xff]
        %v471 = vld [vmem:[%s3 + $0x30] sm:$0xff]
        %v472 = vld [vmem:[%s3 + $0x38] sm:$0xff]
        %v473 = vld [vmem:[%s3 + $0x40] sm:$0xff]
        %v474 = vld [vmem:[%s3 + $0x48] sm:$0xff]
        %v475 = vld [vmem:[%s3 + $0x50] sm:$0xff]
        %v476 = vld [vmem:[%s3 + $0x58] sm:$0xff]
        %v477 = vld [vmem:[%s3 + $0x60] sm:$0xff]
        %v478 = vld [vmem:[%s3 + $0x68] sm:$0xff]
        %v479 = vld [vmem:[%s3 + $0x70] sm:$0xff]
        %v480 = vld [vmem:[%s3 + $0x78] sm:$0xff]
        %v481 = vld [vmem:[%s3 + $0x80] sm:$0xff]
        %v482 = vld [vmem:[%s3 + $0x88] sm:$0xff]
        %v483 = vld [vmem:[%s3 + $0x90] sm:$0xff]
        %v484 = vld [vmem:[%s3 + $0x98] sm:$0xff]
        %v485 = vld [vmem:[%s3 + $0xa0] sm:$0xff]
        %v486 = vld [vmem:[%s3 + $0xa8] sm:$0xff]
        %v487 = vld [vmem:[%s3 + $0xb0] sm:$0xff]
        %v488 = vld [vmem:[%s3 + $0xb8] sm:$0xff]
        %v489 = vld [vmem:[%s3 + $0xc0] sm:$0xff]
        %v490 = vld [vmem:[%s3 + $0xc8] sm:$0xff]
        %v491 = vld [vmem:[%s3 + $0xd0] sm:$0xff]
        %493 = vset.pattern.permute.xlu0 0
        %494 = vperm.xlu0 %493, %v477
        %v495 = vpop.permute.xlu0 %494
        %498 = vset.pattern.permute.xlu0 0
        %499 = vperm.xlu0 %498, %v478
        %v500 = vpop.permute.xlu0 %499
        %503 = vset.pattern.permute.xlu0 0
        %504 = vperm.xlu0 %503, %v479
        %v505 = vpop.permute.xlu0 %504
        %v507 = vmul.f32 %v459, %v495
        %v508 = vmul.f32 %v460, %v495
        %v509 = vmul.f32 %v461, %v500
        %v510 = vmul.f32 %v462, %v500
        %v511 = vmul.f32 %v463, %v505
        %v512 = vmul.f32 %v464, %v505
        %514 = vset.pattern.permute.xlu0 0
        %515 = vperm.xlu0 %514, %v468
        %v516 = vpop.permute.xlu0 %515
        %519 = vset.pattern.permute.xlu0 0
        %520 = vperm.xlu0 %519, %v469
        %v521 = vpop.permute.xlu0 %520
        %524 = vset.pattern.permute.xlu0 0
        %525 = vperm.xlu0 %524, %v470
        %v526 = vpop.permute.xlu0 %525
        %v528 = vmul.f32 %v516, 0.0
        %v529 = vmul.f32 %v459, %v516
        %v530 = vmul.f32 %v460, %v516
        %v531 = vmul.f32 %v521, 0.0
        %v532 = vmul.f32 %v461, %v521
        %v533 = vmul.f32 %v462, %v521
        %v534 = vmul.f32 %v526, 0.0
        %v535 = vmul.f32 %v463, %v526
        %v536 = vmul.f32 %v464, %v526
        %546 = vrot.lane.b32.xlu0 %v528, 16
        %v547 = vpop.permute.xlu0 %546
        %548 = vrot.lane.b32.xlu0 %v529, 16
        %v549 = vpop.permute.xlu0 %548
        %550 = vrot.lane.b32.xlu0 %v530, 16
        %v551 = vpop.permute.xlu0 %550
        %552 = vrot.lane.b32.xlu0 %v531, 16
        %v553 = vpop.permute.xlu0 %552
        %554 = vrot.lane.b32.xlu0 %v532, 16
        %v555 = vpop.permute.xlu0 %554
        %556 = vrot.lane.b32.xlu0 %v533, 16
        %v557 = vpop.permute.xlu0 %556
        %558 = vrot.lane.b32.xlu0 %v534, 16
        %v559 = vpop.permute.xlu0 %558
        %560 = vrot.lane.b32.xlu0 %v535, 16
        %v561 = vpop.permute.xlu0 %560
        %562 = vrot.lane.b32.xlu0 %v536, 16
        %v563 = vpop.permute.xlu0 %562
        %vm564 = vcmask 130048
        %v565 = vsel %vm564, %v547, %v549
        %v566 = vsel %vm564, %v549, %v551
        %v567 = vsel %vm564, %v553, %v555
        %v568 = vsel %vm564, %v555, %v557
        %v569 = vsel %vm564, %v559, %v561
        %v570 = vsel %vm564, %v561, %v563
        %v577 = vadd.f32 %v507, %v565
        %v578 = vadd.f32 %v508, %v566
        %v579 = vadd.f32 %v509, %v567
        %v580 = vadd.f32 %v510, %v568
        %v581 = vadd.f32 %v511, %v569
        %v582 = vadd.f32 %v512, %v570
        %584 = vset.pattern.permute.xlu0 0
        %585 = vperm.xlu0 %584, %v486
        %v586 = vpop.permute.xlu0 %585
        %589 = vset.pattern.permute.xlu0 0
        %590 = vperm.xlu0 %589, %v487
        %v591 = vpop.permute.xlu0 %590
        %594 = vset.pattern.permute.xlu0 0
        %595 = vperm.xlu0 %594, %v488
        %v596 = vpop.permute.xlu0 %595
        %v598 = vmul.f32 %v459, %v586
        %v599 = vmul.f32 %v460, %v586
        %v600 = vmul.f32 %v586, 0.0
        %v601 = vmul.f32 %v461, %v591
        %v602 = vmul.f32 %v462, %v591
        %v603 = vmul.f32 %v591, 0.0
        %v604 = vmul.f32 %v463, %v596
        %v605 = vmul.f32 %v464, %v596
        %v606 = vmul.f32 %v596, 0.0
        %616 = vrot.lane.b32.xlu0 %v598, 112
        %v617 = vpop.permute.xlu0 %616
        %618 = vrot.lane.b32.xlu0 %v599, 112
        %v619 = vpop.permute.xlu0 %618
        %620 = vrot.lane.b32.xlu0 %v600, 112
        %v621 = vpop.permute.xlu0 %620
        %622 = vrot.lane.b32.xlu0 %v601, 112
        %v623 = vpop.permute.xlu0 %622
        %624 = vrot.lane.b32.xlu0 %v602, 112
        %v625 = vpop.permute.xlu0 %624
        %626 = vrot.lane.b32.xlu0 %v603, 112
        %v627 = vpop.permute.xlu0 %626
        %628 = vrot.lane.b32.xlu0 %v604, 112
        %v629 = vpop.permute.xlu0 %628
        %630 = vrot.lane.b32.xlu0 %v605, 112
        %v631 = vpop.permute.xlu0 %630
        %632 = vrot.lane.b32.xlu0 %v606, 112
        %v633 = vpop.permute.xlu0 %632
        %vm634 = vcmask 916480
        %v635 = vsel %vm634, %v617, %v619
        %v636 = vsel %vm634, %v619, %v621
        %v637 = vsel %vm634, %v623, %v625
        %v638 = vsel %vm634, %v625, %v627
        %v639 = vsel %vm634, %v629, %v631
        %v640 = vsel %vm634, %v631, %v633
        %v647 = vadd.f32 %v577, %v635
        %v648 = vadd.f32 %v578, %v636
        %v649 = vadd.f32 %v579, %v637
        %v650 = vadd.f32 %v580, %v638
        %v651 = vadd.f32 %v581, %v639
        %v652 = vadd.f32 %v582, %v640
        %654 = vset.pattern.permute.xlu0 0
        %655 = vperm.xlu0 %654, %v465
        %v656 = vpop.permute.xlu0 %655
        %659 = vset.pattern.permute.xlu0 0
        %660 = vperm.xlu0 %659, %v466
        %v661 = vpop.permute.xlu0 %660
        %664 = vset.pattern.permute.xlu0 0
        %665 = vperm.xlu0 %664, %v467
        %v666 = vpop.permute.xlu0 %665
        %v668 = vmul.f32 %v656, 0.0
        %v669 = vmul.f32 %v459, %v656
        %v670 = vmul.f32 %v460, %v656
        %v671 = vmul.f32 %v661, 0.0
        %v672 = vmul.f32 %v461, %v661
        %v673 = vmul.f32 %v462, %v661
        %v674 = vmul.f32 %v666, 0.0
        %v675 = vmul.f32 %v463, %v666
        %v676 = vmul.f32 %v464, %v666
        %678 = vset.pattern.permute.xlu0 0
        %679 = vperm.xlu0 %678, %v474
        %v680 = vpop.permute.xlu0 %679
        %683 = vset.pattern.permute.xlu0 0
        %684 = vperm.xlu0 %683, %v475
        %v685 = vpop.permute.xlu0 %684
        %688 = vset.pattern.permute.xlu0 0
        %689 = vperm.xlu0 %688, %v476
        %v690 = vpop.permute.xlu0 %689
        %v692 = vmul.f32 %v680, 0.0
        %v693 = vmul.f32 %v459, %v680
        %v694 = vmul.f32 %v460, %v680
        %v695 = vmul.f32 %v685, 0.0
        %v696 = vmul.f32 %v461, %v685
        %v697 = vmul.f32 %v462, %v685
        %v698 = vmul.f32 %v690, 0.0
        %v699 = vmul.f32 %v463, %v690
        %v700 = vmul.f32 %v464, %v690
        %710 = vrot.lane.b32.xlu0 %v692, 112
        %v711 = vpop.permute.xlu0 %710
        %712 = vrot.lane.b32.xlu0 %v693, 112
        %v713 = vpop.permute.xlu0 %712
        %714 = vrot.lane.b32.xlu0 %v694, 112
        %v715 = vpop.permute.xlu0 %714
        %716 = vrot.lane.b32.xlu0 %v695, 112
        %v717 = vpop.permute.xlu0 %716
        %718 = vrot.lane.b32.xlu0 %v696, 112
        %v719 = vpop.permute.xlu0 %718
        %720 = vrot.lane.b32.xlu0 %v697, 112
        %v721 = vpop.permute.xlu0 %720
        %722 = vrot.lane.b32.xlu0 %v698, 112
        %v723 = vpop.permute.xlu0 %722
        %724 = vrot.lane.b32.xlu0 %v699, 112
        %v725 = vpop.permute.xlu0 %724
        %726 = vrot.lane.b32.xlu0 %v700, 112
        %v727 = vpop.permute.xlu0 %726
        %v728 = vsel %vm634, %v711, %v713
        %v729 = vsel %vm634, %v713, %v715
        %v730 = vsel %vm634, %v717, %v719
        %v731 = vsel %vm634, %v719, %v721
        %v732 = vsel %vm634, %v723, %v725
        %v733 = vsel %vm634, %v725, %v727
        %v743 = vadd.f32 %v668, %v728
        %v744 = vadd.f32 %v669, %v729
        %v745 = vadd.f32 %v670, %v715
        %v746 = vadd.f32 %v671, %v730
        %v747 = vadd.f32 %v672, %v731
        %v748 = vadd.f32 %v673, %v721
        %v749 = vadd.f32 %v674, %v732
        %v750 = vadd.f32 %v675, %v733
        %v751 = vadd.f32 %v676, %v727
        %753 = vset.pattern.permute.xlu0 0
        %754 = vperm.xlu0 %753, %v483
        %v755 = vpop.permute.xlu0 %754
        %758 = vset.pattern.permute.xlu0 0
        %759 = vperm.xlu0 %758, %v484
        %v760 = vpop.permute.xlu0 %759
        %763 = vset.pattern.permute.xlu0 0
        %764 = vperm.xlu0 %763, %v485
        %v765 = vpop.permute.xlu0 %764
        %v767 = vmul.f32 %v459, %v755
        %v768 = vmul.f32 %v460, %v755
        %v769 = vmul.f32 %v755, 0.0
        %v770 = vmul.f32 %v461, %v760
        %v771 = vmul.f32 %v462, %v760
        %v772 = vmul.f32 %v760, 0.0
        %v773 = vmul.f32 %v463, %v765
        %v774 = vmul.f32 %v464, %v765
        %v775 = vmul.f32 %v765, 0.0
        %785 = vrot.lane.b32.xlu0 %v767, 96
        %v786 = vpop.permute.xlu0 %785
        %787 = vrot.lane.b32.xlu0 %v768, 96
        %v788 = vpop.permute.xlu0 %787
        %789 = vrot.lane.b32.xlu0 %v769, 96
        %v790 = vpop.permute.xlu0 %789
        %791 = vrot.lane.b32.xlu0 %v770, 96
        %v792 = vpop.permute.xlu0 %791
        %793 = vrot.lane.b32.xlu0 %v771, 96
        %v794 = vpop.permute.xlu0 %793
        %795 = vrot.lane.b32.xlu0 %v772, 96
        %v796 = vpop.permute.xlu0 %795
        %797 = vrot.lane.b32.xlu0 %v773, 96
        %v798 = vpop.permute.xlu0 %797
        %799 = vrot.lane.b32.xlu0 %v774, 96
        %v800 = vpop.permute.xlu0 %799
        %801 = vrot.lane.b32.xlu0 %v775, 96
        %v802 = vpop.permute.xlu0 %801
        %vm803 = vcmask 785408
        %v804 = vsel %vm803, %v786, %v788
        %v805 = vsel %vm803, %v788, %v790
        %v806 = vsel %vm803, %v792, %v794
        %v807 = vsel %vm803, %v794, %v796
        %v808 = vsel %vm803, %v798, %v800
        %v809 = vsel %vm803, %v800, %v802
        %v819 = vadd.f32 %v743, %v786
        %v820 = vadd.f32 %v744, %v804
        %v821 = vadd.f32 %v745, %v805
        %v822 = vadd.f32 %v746, %v792
        %v823 = vadd.f32 %v747, %v806
        %v824 = vadd.f32 %v748, %v807
        %v825 = vadd.f32 %v749, %v798
        %v826 = vadd.f32 %v750, %v808
        %v827 = vadd.f32 %v751, %v809
        %829 = vset.pattern.permute.xlu0 0
        %830 = vperm.xlu0 %829, %v471
        %v831 = vpop.permute.xlu0 %830
        %834 = vset.pattern.permute.xlu0 0
        %835 = vperm.xlu0 %834, %v472
        %v836 = vpop.permute.xlu0 %835
        %839 = vset.pattern.permute.xlu0 0
        %840 = vperm.xlu0 %839, %v473
        %v841 = vpop.permute.xlu0 %840
        %v843 = vmul.f32 %v831, 0.0
        %v844 = vmul.f32 %v459, %v831
        %v845 = vmul.f32 %v460, %v831
        %v846 = vmul.f32 %v836, 0.0
        %v847 = vmul.f32 %v461, %v836
        %v848 = vmul.f32 %v462, %v836
        %v849 = vmul.f32 %v841, 0.0
        %v850 = vmul.f32 %v463, %v841
        %v851 = vmul.f32 %v464, %v841
        %853 = vset.pattern.permute.xlu0 0
        %854 = vperm.xlu0 %853, %v480
        %v855 = vpop.permute.xlu0 %854
        %858 = vset.pattern.permute.xlu0 0
        %859 = vperm.xlu0 %858, %v481
        %v860 = vpop.permute.xlu0 %859
        %863 = vset.pattern.permute.xlu0 0
        %864 = vperm.xlu0 %863, %v482
        %v865 = vpop.permute.xlu0 %864
        %v867 = vmul.f32 %v459, %v855
        %v868 = vmul.f32 %v460, %v855
        %v869 = vmul.f32 %v855, 0.0
        %v870 = vmul.f32 %v461, %v860
        %v871 = vmul.f32 %v462, %v860
        %v872 = vmul.f32 %v860, 0.0
        %v873 = vmul.f32 %v463, %v865
        %v874 = vmul.f32 %v464, %v865
        %v875 = vmul.f32 %v865, 0.0
        %885 = vrot.lane.b32.xlu0 %v867, 112
        %v886 = vpop.permute.xlu0 %885
        %887 = vrot.lane.b32.xlu0 %v868, 112
        %v888 = vpop.permute.xlu0 %887
        %889 = vrot.lane.b32.xlu0 %v869, 112
        %v890 = vpop.permute.xlu0 %889
        %891 = vrot.lane.b32.xlu0 %v870, 112
        %v892 = vpop.permute.xlu0 %891
        %893 = vrot.lane.b32.xlu0 %v871, 112
        %v894 = vpop.permute.xlu0 %893
        %895 = vrot.lane.b32.xlu0 %v872, 112
        %v896 = vpop.permute.xlu0 %895
        %897 = vrot.lane.b32.xlu0 %v873, 112
        %v898 = vpop.permute.xlu0 %897
        %899 = vrot.lane.b32.xlu0 %v874, 112
        %v900 = vpop.permute.xlu0 %899
        %901 = vrot.lane.b32.xlu0 %v875, 112
        %v902 = vpop.permute.xlu0 %901
        %v903 = vsel %vm634, %v886, %v888
        %v904 = vsel %vm634, %v888, %v890
        %v905 = vsel %vm634, %v892, %v894
        %v906 = vsel %vm634, %v894, %v896
        %v907 = vsel %vm634, %v898, %v900
        %v908 = vsel %vm634, %v900, %v902
        %v918 = vadd.f32 %v843, %v886
        %v919 = vadd.f32 %v844, %v903
        %v920 = vadd.f32 %v845, %v904
        %v921 = vadd.f32 %v846, %v892
        %v922 = vadd.f32 %v847, %v905
        %v923 = vadd.f32 %v848, %v906
        %v924 = vadd.f32 %v849, %v898
        %v925 = vadd.f32 %v850, %v907
        %v926 = vadd.f32 %v851, %v908
        %928 = vset.pattern.permute.xlu0 0
        %929 = vperm.xlu0 %928, %v489
        %v930 = vpop.permute.xlu0 %929
        %933 = vset.pattern.permute.xlu0 0
        %934 = vperm.xlu0 %933, %v490
        %v935 = vpop.permute.xlu0 %934
        %938 = vset.pattern.permute.xlu0 0
        %939 = vperm.xlu0 %938, %v491
        %v940 = vpop.permute.xlu0 %939
        %v942 = vmul.f32 %v459, %v930
        %v943 = vmul.f32 %v460, %v930
        %v944 = vmul.f32 %v930, 0.0
        %v945 = vmul.f32 %v461, %v935
        %v946 = vmul.f32 %v462, %v935
        %v947 = vmul.f32 %v935, 0.0
        %v948 = vmul.f32 %v463, %v940
        %v949 = vmul.f32 %v464, %v940
        %v950 = vmul.f32 %v940, 0.0
        %960 = vrot.lane.b32.xlu0 %v942, 96
        %v961 = vpop.permute.xlu0 %960
        %962 = vrot.lane.b32.xlu0 %v943, 96
        %v963 = vpop.permute.xlu0 %962
        %964 = vrot.lane.b32.xlu0 %v944, 96
        %v965 = vpop.permute.xlu0 %964
        %966 = vrot.lane.b32.xlu0 %v945, 96
        %v967 = vpop.permute.xlu0 %966
        %968 = vrot.lane.b32.xlu0 %v946, 96
        %v969 = vpop.permute.xlu0 %968
        %970 = vrot.lane.b32.xlu0 %v947, 96
        %v971 = vpop.permute.xlu0 %970
        %972 = vrot.lane.b32.xlu0 %v948, 96
        %v973 = vpop.permute.xlu0 %972
        %974 = vrot.lane.b32.xlu0 %v949, 96
        %v975 = vpop.permute.xlu0 %974
        %976 = vrot.lane.b32.xlu0 %v950, 96
        %v977 = vpop.permute.xlu0 %976
        %v978 = vsel %vm803, %v961, %v963
        %v979 = vsel %vm803, %v963, %v965
        %v980 = vsel %vm803, %v967, %v969
        %v981 = vsel %vm803, %v969, %v971
        %v982 = vsel %vm803, %v973, %v975
        %v983 = vsel %vm803, %v975, %v977
        %v993 = vadd.f32 %v918, %v961
        %v994 = vadd.f32 %v919, %v978
        %v995 = vadd.f32 %v920, %v979
        %v996 = vadd.f32 %v921, %v967
        %v997 = vadd.f32 %v922, %v980
        %v998 = vadd.f32 %v923, %v981
        %v999 = vadd.f32 %v924, %v973
        %v1000 = vadd.f32 %v925, %v982
        %v1001 = vadd.f32 %v926, %v983
        %v1002 = vld [vmem:[%s7] sm:$0x3]
        %v1004 = vlaneseq
        %v1005 = vshrl.u32 %v1004, 7
        %v1006 = vsub.s32 0, %v1005
        %v1007 = vrot.slane %v1002, %v1006
        %v1008 = vlaneseq
        %v1009 = vshrl.u32 %v1008, 7
        %v1010 = vsub.s32 1, %v1009
        %v1011 = vrot.slane %v1002, %v1010
        %1012 = vrot.lane.b32.xlu0 %v1007, 111
        %v1013 = vpop.permute.xlu0 %1012
        %1014 = vrot.lane.b32.xlu0 %v1011, 111
        %v1015 = vpop.permute.xlu0 %1014
        %vm1016 = vcmask 908288
        %v1017 = vsel %vm1016, %v1013, %v1015
        %v1021 = vmul.f32 %v819, %v1013
        %v1022 = vmul.f32 %v820, %v1017
        %v1023 = vmul.f32 %v821, %v1015
        %v1024 = vmul.f32 %v822, %v1013
        %v1025 = vmul.f32 %v823, %v1017
        %v1026 = vmul.f32 %v824, %v1015
        %v1027 = vmul.f32 %v825, %v1013
        %v1028 = vmul.f32 %v826, %v1017
        %v1029 = vmul.f32 %v827, %v1015
        %1039 = vrot.lane.b32.xlu0 %v1021, 17
        %v1040 = vpop.permute.xlu0 %1039
        %1041 = vrot.lane.b32.xlu0 %v1022, 17
        %v1042 = vpop.permute.xlu0 %1041
        %1043 = vrot.lane.b32.xlu0 %v1023, 17
        %v1044 = vpop.permute.xlu0 %1043
        %1045 = vrot.lane.b32.xlu0 %v1024, 17
        %v1046 = vpop.permute.xlu0 %1045
        %1047 = vrot.lane.b32.xlu0 %v1025, 17
        %v1048 = vpop.permute.xlu0 %1047
        %1049 = vrot.lane.b32.xlu0 %v1026, 17
        %v1050 = vpop.permute.xlu0 %1049
        %1051 = vrot.lane.b32.xlu0 %v1027, 17
        %v1052 = vpop.permute.xlu0 %1051
        %1053 = vrot.lane.b32.xlu0 %v1028, 17
        %v1054 = vpop.permute.xlu0 %1053
        %1055 = vrot.lane.b32.xlu0 %v1029, 17
        %v1056 = vpop.permute.xlu0 %1055
        %vm1057 = vcmask 138240
        %v1058 = vsel %vm1057, %v1040, %v1042
        %v1059 = vsel %vm1057, %v1042, %v1044
        %v1060 = vsel %vm1057, %v1046, %v1048
        %v1061 = vsel %vm1057, %v1048, %v1050
        %v1062 = vsel %vm1057, %v1052, %v1054
        %v1063 = vsel %vm1057, %v1054, %v1056
        %v1070 = vadd.f32 %v647, %v1058
        %v1071 = vadd.f32 %v648, %v1059
        %v1072 = vadd.f32 %v649, %v1060
        %v1073 = vadd.f32 %v650, %v1061
        %v1074 = vadd.f32 %v651, %v1062
        %v1075 = vadd.f32 %v652, %v1063
        %v1076 = vld [vmem:[%s8] sm:$0x3]
        %v1078 = vlaneseq
        %v1079 = vshrl.u32 %v1078, 7
        %v1080 = vsub.s32 0, %v1079
        %v1081 = vrot.slane %v1076, %v1080
        %v1082 = vlaneseq
        %v1083 = vshrl.u32 %v1082, 7
        %v1084 = vsub.s32 1, %v1083
        %v1085 = vrot.slane %v1076, %v1084
        %1086 = vrot.lane.b32.xlu0 %v1081, 113
        %v1087 = vpop.permute.xlu0 %1086
        %1088 = vrot.lane.b32.xlu0 %v1085, 113
        %v1089 = vpop.permute.xlu0 %1088
        %vm1090 = vcmask 924672
        %v1091 = vsel %vm1090, %v1087, %v1089
        %v1095 = vmul.f32 %v993, %v1087
        %v1096 = vmul.f32 %v994, %v1091
        %v1097 = vmul.f32 %v995, %v1089
        %v1098 = vmul.f32 %v996, %v1087
        %v1099 = vmul.f32 %v997, %v1091
        %v1100 = vmul.f32 %v998, %v1089
        %v1101 = vmul.f32 %v999, %v1087
        %v1102 = vmul.f32 %v1000, %v1091
        %v1103 = vmul.f32 %v1001, %v1089
        %1113 = vrot.lane.b32.xlu0 %v1095, 15
        %v1114 = vpop.permute.xlu0 %1113
        %1115 = vrot.lane.b32.xlu0 %v1096, 15
        %v1116 = vpop.permute.xlu0 %1115
        %1117 = vrot.lane.b32.xlu0 %v1097, 15
        %v1118 = vpop.permute.xlu0 %1117
        %1119 = vrot.lane.b32.xlu0 %v1098, 15
        %v1120 = vpop.permute.xlu0 %1119
        %1121 = vrot.lane.b32.xlu0 %v1099, 15
        %v1122 = vpop.permute.xlu0 %1121
        %1123 = vrot.lane.b32.xlu0 %v1100, 15
        %v1124 = vpop.permute.xlu0 %1123
        %1125 = vrot.lane.b32.xlu0 %v1101, 15
        %v1126 = vpop.permute.xlu0 %1125
        %1127 = vrot.lane.b32.xlu0 %v1102, 15
        %v1128 = vpop.permute.xlu0 %1127
        %1129 = vrot.lane.b32.xlu0 %v1103, 15
        %v1130 = vpop.permute.xlu0 %1129
        %vm1131 = vcmask 121856
        %v1132 = vsel %vm1131, %v1114, %v1116
        %v1133 = vsel %vm1131, %v1116, %v1118
        %v1134 = vsel %vm1131, %v1120, %v1122
        %v1135 = vsel %vm1131, %v1122, %v1124
        %v1136 = vsel %vm1131, %v1126, %v1128
        %v1137 = vsel %vm1131, %v1128, %v1130
        %v1144 = vadd.f32 %v1070, %v1132
        %v1145 = vadd.f32 %v1071, %v1133
        %v1146 = vadd.f32 %v1072, %v1134
        %v1147 = vadd.f32 %v1073, %v1135
        %v1148 = vadd.f32 %v1074, %v1136
        %v1149 = vadd.f32 %v1075, %v1137
        %v1150 = vld [vmem:[%s4] sm:$0xff]
        %v1151 = vld [vmem:[%s4 + $0x8] sm:$0xff]
        %v1152 = vld [vmem:[%s4 + $0x10] sm:$0xff]
        %1154 = vset.pattern.permute.xlu0 0
        %1155 = vperm.xlu0 %1154, %v1150
        %v1156 = vpop.permute.xlu0 %1155
        %1159 = vset.pattern.permute.xlu0 0
        %1160 = vperm.xlu0 %1159, %v1151
        %v1161 = vpop.permute.xlu0 %1160
        %1164 = vset.pattern.permute.xlu0 0
        %1165 = vperm.xlu0 %1164, %v1152
        %v1166 = vpop.permute.xlu0 %1165
        %v1168 = vadd.f32 %v1144, %v1156
        %v1169 = vadd.f32 %v1145, %v1156
        %v1170 = vadd.f32 %v1146, %v1161
        %v1171 = vadd.f32 %v1147, %v1161
        %v1172 = vadd.f32 %v1148, %v1166
        %v1173 = vadd.f32 %v1149, %v1166
        %v1174 = vmax.f32 %v1168, 0.0
        %v1175 = vmax.f32 %v1169, 0.0
        %v1176 = vmax.f32 %v1170, 0.0
        %v1177 = vmax.f32 %v1171, 0.0
        %v1178 = vmax.f32 %v1172, 0.0
        %v1179 = vmax.f32 %v1173, 0.0
        %v1180 = vmin.f32 %v1174, 6.0
        %v1181 = vmin.f32 %v1175, 6.0
        %v1182 = vmin.f32 %v1176, 6.0
        %v1183 = vmin.f32 %v1177, 6.0
        %v1184 = vmin.f32 %v1178, 6.0
        %v1185 = vmin.f32 %v1179, 6.0
        %v1186 = vld [vmem:[%s5] sm:$0xf]
        %v1187 = vld [vmem:[%s6] sm:$0xf]
        %1189 = vset.pattern.permute.xlu0 0
        %1190 = vperm.xlu0 %1189, %v1187
        %v1191 = vpop.permute.xlu0 %1190
        %vm1193 = vcmask 195584
        %v1195 = vsel %vm1193, %v1186, 0
        %1197 = vmatprep.subr.mxu0 %v1181
        %1198 = vmatpush1.msra.mxu0 %v1180
        %1199 = vmatprep.subr.mxu0 %v1183
        %1200 = vmatpush1.msra.mxu0 %v1182
        %1201 = vmatprep.subr.mxu0 %v1185
        %1202 = vmatpush1.msra.mxu0 %v1184
        %1203 = vmatprep.subr.mxu0 0.0
        %1204 = vmatpush1.msra.mxu0 0.0
        %1205 = vmatprep.subr.mxu0 0.0
        %1206 = vmatpush1.msra.mxu0 0.0
        %1207 = vmatprep.subr.mxu0 0.0
        %1208 = vmatpush1.msra.mxu0 0.0
        %1209 = vmatprep.subr.mxu0 0.0
        %1210 = vmatpush1.msra.mxu0 0.0
        %1211 = vmatprep.subr.mxu0 0.0
        %1212 = vmatpush1.msra.mxu0 0.0
        %1213 = vmatprep.subr.mxu0 0.0
        %1214 = vmatpush1.msra.mxu0 0.0
        %1215 = vmatprep.subr.mxu0 0.0
        %1216 = vmatpush1.msra.mxu0 0.0
        %1217 = vmatprep.subr.mxu0 0.0
        %1218 = vmatpush1.msra.mxu0 0.0
        %1219 = vmatprep.subr.mxu0 0.0
        %1220 = vmatpush1.msra.mxu0 0.0
        %1221 = vmatprep.subr.mxu0 0.0
        %1222 = vmatpush1.msra.mxu0 0.0
        %1223 = vmatprep.subr.mxu0 0.0
        %1224 = vmatpush1.msra.mxu0 0.0
        %1225 = vmatprep.subr.mxu0 0.0
        %1226 = vmatpush1.msra.mxu0 0.0
        %1227 = vmatprep.subr.mxu0 0.0
        %1228 = vmatpush1.msra.mxu0 0.0
        %1229 = vmatprep.subr.mxu0 0.0
        %1230 = vmatpush1.msra.mxu0 0.0
        %1231 = vmatprep.subr.mxu0 0.0
        %1232 = vmatpush1.msra.mxu0 0.0
        %1233 = vmatprep.subr.mxu0 0.0
        %1234 = vmatpush1.msra.mxu0 0.0
        %1235 = vmatprep.subr.mxu0 0.0
        %1236 = vmatpush1.msra.mxu0 0.0
        %1237 = vmatprep.subr.mxu0 0.0
        %1238 = vmatpush1.msra.mxu0 0.0
        %1239 = vmatprep.subr.mxu0 0.0
        %1240 = vmatpush1.msra.mxu0 0.0
        %1241 = vmatprep.subr.mxu0 0.0
        %1242 = vmatpush1.msra.mxu0 0.0
        %1243 = vmatprep.subr.mxu0 0.0
        %1244 = vmatpush1.msra.mxu0 0.0
        %1245 = vmatprep.subr.mxu0 0.0
        %1246 = vmatpush1.msra.mxu0 0.0
        %1247 = vmatprep.subr.mxu0 0.0
        %1248 = vmatpush1.msra.mxu0 0.0
        %1249 = vmatprep.subr.mxu0 0.0
        %1250 = vmatpush1.msra.mxu0 0.0
        %1251 = vmatprep.subr.mxu0 0.0
        %1252 = vmatpush1.msra.mxu0 0.0
        %1253 = vmatprep.subr.mxu0 0.0
        %1254 = vmatpush1.msra.mxu0 0.0
        %1255 = vmatprep.subr.mxu0 0.0
        %1256 = vmatpush1.msra.mxu0 0.0
        %1257 = vmatprep.subr.mxu0 0.0
        %1258 = vmatpush1.msra.mxu0 0.0
        %1259 = vmatprep.subr.mxu0 0.0
        %1260 = vmatpush1.msra.mxu0 0.0
        %1261 = vmatprep.mubr.f32.mxu0 0.0
        %1262 = vmatmul.mubr.f32.gmra.mrb[0].mxu0 %v1195
        %v1263 = vpop.f32.mrb[0].mxu0
        %v1264 = vadd.f32 %v1191, %v1263
        %v1265 = vpop.f32.mrb[0].mxu0
        %v1266 = vadd.f32 %v1191, %v1265
        %1267 = vdwg.mxu0
        %v1269 = vadd.f32 %v1264, %v331
        %v1270 = vadd.f32 %v1266, %v354
        %v1273 = vcombine.low %v1269, %v1270
        %1275 = vst [vmem:[%s325] sm:$0xff] %v1273
        %s1276 = sand.u32 %s225, 1
        %s1277 = scalar_lea.sflag [#allocation3], %s1276
        %s1278 = sand.u32 %s225, 1
        %s1279 = smul.addr %s1278, 8
        %s1280 = scalar_lea.vmem [#allocation2], %s1279
        // Predicated region
        $region57: #{tpu_custom_call.1} parent=55 // pred_check
          %p1281 = pneg %p235
        $region58: #{tpu_custom_call.1} parent=55 // pred_check_branch
          %1283 = sbr.rel (%p1281) target = $region60
        $region59: #{tpu_custom_call.1} parent=55 // pred_region
          %s1285 = ssub.s32 128, 128
          %1286 = vsyncadd %s1277, %s1285
          %s1287 = smul.addr %s23, 2
          %s1288 = smul.addr %s1287, 64
          %s1289 = scalar_lea.hbm %s9, %s1288
          %s1291 = sshll.u32 %s1280, 4
          %s1292 = int_to_ptr.vmem [resolvable:$true] %s1291
          %1294 = dma.vmem_to_hbm [thread:$0]  %s1292, 128, %s1289, %s1277
        $region60: #{tpu_custom_call.1} parent=55 // pred_fallthru
          _
      $region56: #{tpu_custom_call.1} parent=5 // pred_fallthru
        _
      %p1295 = scmp.le.s32.totalorder 2, %s18
      // Predicated region
      $region61: #{tpu_custom_call.1} parent=5 // pred_check
        %p1296 = pneg %p1295
      $region62: #{tpu_custom_call.1} parent=5 // pred_check_branch
        %1298 = sbr.rel (%p1296) target = $region64
      $region63: #{tpu_custom_call.1} parent=5 // pred_region
        %s1299 = ssub.s32 %s18, 2
        // Predicated region
        $region65: #{tpu_custom_call.1} parent=63 // pred_check
          %p1300 = pneg %p241
        $region66: #{tpu_custom_call.1} parent=63 // pred_check_branch
          %1302 = sbr.rel (%p1300) target = $region68
        $region67: #{tpu_custom_call.1} parent=63 // pred_region
          %s1303 = sand.u32 %s226, 1
          %s1304 = scalar_lea.sflag [#allocation3], %s1303
          %s1305 = sand.u32 %s226, 1
          %s1306 = smul.addr %s1305, 8
          %s1307 = scalar_lea.vmem [#allocation2], %s1306
          %1308 = dma.done %s1304, 128
        $region68: #{tpu_custom_call.1} parent=63 // pred_fallthru
          _
      $region64: #{tpu_custom_call.1} parent=5 // pred_fallthru
        _
    $region6: #{tpu_custom_call.1} parent=1 // loop_footer
      %s22 = sadd.s32 1, %s18
    $region7: #{tpu_custom_call.1} parent=1 // loop_footer_branch
      %17 = sbr.rel target = $region3
    $region8: #{tpu_custom_call.1} parent=1 // loop_exit
      _
    %1309 = vsyncpa [#allocation3], 1
    %s1310 = scalar_lea.sflag [#allocation3], 1
    %1311 = vsyncpa %s1310, 1

</llo_original>
